<compile_context>
chip_gen: v7x
topology: tpu7x:2x2x1
jax: 0.10.0
libtpu: 0.0.40
codegen_flags: <defaults>
</compile_context>

<pallas_src>
import jax
import jax.numpy as jnp
from jax.experimental import pallas as pl
from jax.experimental.pallas import tpu as pltpu


def _residual_mlp_kernel(x_ref, w1_ref, b1_ref, w2_ref, b2_ref, o_ref, acc_ref):
    # Kernel-visible shapes (grid = (N//bn, Hm//ck)):
    #   x:  (bn, H) f32      w1: (H, ck)  bf16    b1: (1, ck) f32
    #   w2: (ck, H) bf16     b2: (1, H)   f32     o:  (bn, H) f32
    #   acc_ref: (bn, H) f32 VMEM scratch, persists across the K grid axis.
    k = pl.program_id(1)

    @pl.when(k == 0)
    def _init():
        acc_ref[...] = jnp.zeros_like(acc_ref)

    # bf16 MXU operands, f32 accumulation; bias/ReLU in f32 on the VPU
    # (v5e has no bf16 VALU path).
    x_bf = x_ref[...].astype(jnp.bfloat16)
    h = jnp.dot(x_bf, w1_ref[...], preferred_element_type=jnp.float32) + b1_ref[...]
    h = jnp.maximum(h, 0.0)
    acc_ref[...] += jnp.dot(h.astype(jnp.bfloat16), w2_ref[...],
                            preferred_element_type=jnp.float32)

    @pl.when(k == pl.num_programs(1) - 1)
    def _finalize():
        # Residual x is re-read from VMEM only here (cheap vld), so no f32
        # copy of x stays live across the reduction.
        o_ref[...] = (acc_ref[...] + b2_ref[...]
                      + x_ref[...].astype(jnp.float32)).astype(o_ref.dtype)


def prepare_residual_block_params(w1, b1, w2, b2):
    """One-time param prep: bf16 MXU weights, f32 2-D biases.

    Hoisted out of the forward so the f32->bf16 weight casts are not re-done
    (and re-written to HBM) on every call.
    """
    H, Hm = w1.shape
    return (w1.astype(jnp.bfloat16),
            b1.reshape(1, Hm).astype(jnp.float32),
            w2.astype(jnp.bfloat16),
            b2.reshape(1, H).astype(jnp.float32))


def _pick_block_n(N, block_n):
    bn = min(block_n, N)
    if bn == N:
        return bn
    if bn >= 128:
        return (bn // 128) * 128          # MXU-native / bf16-sublane friendly
    return max(16, (bn // 16) * 16)        # bf16 sublane packing is 16


def _pick_block_k(Hm, block_k):
    target = min(block_k if block_k is not None else 512, Hm)
    # Prefer the largest multiple of 128 that divides Hm and is <= target.
    c = (target // 128) * 128
    while c >= 128:
        if Hm % c == 0:
            return c
        c -= 128
    # Fallback: largest divisor of Hm <= target (never silently the full Hm).
    for c in range(target, 0, -1):
        if Hm % c == 0:
            return c
    return Hm


def residual_block(x, params, *, block_n=256, block_k=None):
    """ResidualBlock(MLP) forward.

    x: (N, H) f32.  params: output of prepare_residual_block_params, i.e.
    (w1 bf16 (H, 4H), b1 f32 (1, 4H), w2 bf16 (4H, H), b2 f32 (1, H)).
    """
    w1_bf, b1_2d, w2_bf, b2_2d = params
    N, H = x.shape
    Hm = w1_bf.shape[1]

    bn = _pick_block_n(N, block_n)
    ck = _pick_block_k(Hm, block_k)

    grid_n = pl.cdiv(N, bn)
    grid_k = Hm // ck

    itemsize = jnp.dtype(x.dtype).itemsize

    # VMEM budget: double-buffered pipelined tiles + the f32 scratch accumulator.
    est = (2 * (bn * H * itemsize        # x tile
                + bn * H * itemsize      # out tile
                + H * ck * 2             # w1 K-tile (bf16)
                + ck * 4                 # b1 K-tile
                + ck * H * 2             # w2 K-tile (bf16)
                + H * 4)                 # b2
           + bn * H * 4)                 # accumulator scratch
    # Leave headroom under v7x's 64 MiB physical VMEM; plenty on v5e/v6e.
    vmem_limit = int(min(56 * 2 ** 20, max(2 * est, 32 * 2 ** 20)))

    cost = pl.CostEstimate(
        flops=4 * N * H * Hm,            # two N*H*4H matmuls
        transcendentals=0,
        bytes_accessed=(N * H * itemsize * 2                    # x in, out
                        + grid_n * (2 * H * Hm * 2 + (Hm + H) * 4)),  # streamed weights/biases
    )

    kernel = pl.pallas_call(
        _residual_mlp_kernel,
        out_shape=jax.ShapeDtypeStruct((N, H), x.dtype),
        grid_spec=pltpu.PrefetchScalarGridSpec(
            num_scalar_prefetch=0,
            grid=(grid_n, grid_k),
            in_specs=[
                pl.BlockSpec((bn, H), lambda i, k: (i, 0)),    # x tile (reused over k)
                pl.BlockSpec((H, ck), lambda i, k: (0, k)),    # w1 K-tile (streamed)
                pl.BlockSpec((1, ck), lambda i, k: (0, k)),    # b1 K-tile (streamed)
                pl.BlockSpec((ck, H), lambda i, k: (k, 0)),    # w2 K-tile (streamed)
                pl.BlockSpec((1, H), lambda i, k: (0, 0)),     # b2 (constant block)
            ],
            out_specs=pl.BlockSpec((bn, H), lambda i, k: (i, 0)),
            scratch_shapes=[pltpu.VMEM((bn, H), jnp.float32)],
        ),
        compiler_params=pltpu.CompilerParams(
            # Row axis independent (shards across v7x's 2 TCs); K is a reduction.
            dimension_semantics=("parallel", "arbitrary"),
            vmem_limit_bytes=vmem_limit,
        ),
        cost_estimate=cost,
    )
    return kernel(x, w1_bf, b1_2d, w2_bf, b2_2d)


def residual_block_ref(x, w1, b1, w2, b2):
    """Pure-JAX f32 reference mirroring the PyTorch forward."""
    h = jnp.maximum(x @ w1 + b1, 0.0)
    return h @ w2 + b2 + x


def residual_block_ref_bf16(x, w1, b1, w2, b2):
    """Reference with the same bf16-operand / f32-accumulate math as the kernel."""
    xb = x.astype(jnp.bfloat16)
    h = jnp.dot(xb, w1.astype(jnp.bfloat16),
                preferred_element_type=jnp.float32) + b1
    h = jnp.maximum(h, 0.0)
    y = jnp.dot(h.astype(jnp.bfloat16), w2.astype(jnp.bfloat16),
                preferred_element_type=jnp.float32)
    return y + b2 + x


if __name__ == "__main__":
    # Small but tile-aligned shapes: H a multiple of 128 keeps the output store
    # lane-dense; N = 256 with bn = 128 gives 2 parallel row steps (v7x's 2 TCs);
    # block_k = 256 gives 2 K steps (4H = 512), exercising the reduction axis.
    N, H = 256, 128
    Hm = 4 * H

    key = jax.random.PRNGKey(0)
    kx, kw1, kb1, kw2, kb2 = jax.random.split(key, 5)

    x = jax.random.normal(kx, (N, H), dtype=jnp.float32)
    # PyTorch nn.Linear stores weight as (out, in); we build (in, out) directly
    # (equivalent to transposing the PyTorch weight).
    w1 = jax.random.normal(kw1, (H, Hm), dtype=jnp.float32) * 0.05
    b1 = jax.random.normal(kb1, (Hm,), dtype=jnp.float32) * 0.05
    w2 = jax.random.normal(kw2, (Hm, H), dtype=jnp.float32) * 0.05
    b2 = jax.random.normal(kb2, (H,), dtype=jnp.float32) * 0.05

    # Hoisted one-time prep (bf16 weight casts are NOT in the hot path).
    params = prepare_residual_block_params(w1, b1, w2, b2)

    out = residual_block(x, params, block_n=128, block_k=256)
    out = jax.block_until_ready(out)

    ref_bf = residual_block_ref_bf16(x, w1, b1, w2, b2)
    ref_f32 = residual_block_ref(x, w1, b1, w2, b2)

    assert out.shape == (N, H) and out.dtype == jnp.float32
    # Tight check against the bf16-operand reference (same math as the kernel).
    assert jnp.allclose(out, ref_bf, atol=1e-3, rtol=1e-3), "mismatch vs bf16 ref"
    # Loose sanity check against the full-f32 reference (bf16 operand rounding).
    assert jnp.allclose(out, ref_f32, atol=5e-2, rtol=5e-2), "mismatch vs f32 ref"

    print("KERNEL_OK")
</pallas_src>

<mosaic_0001>
module attributes {stable_mosaic.version = 11 : i64} {
  func.func @_residual_mlp_kernel(%arg0: i32, %arg1: i32, %arg2: memref<128x128xf32, #tpu.memory_space<vmem>>, %arg3: memref<128x256xbf16, #tpu.memory_space<vmem>>, %arg4: memref<1x256xf32, #tpu.memory_space<vmem>>, %arg5: memref<256x128xbf16, #tpu.memory_space<vmem>>, %arg6: memref<1x128xf32, #tpu.memory_space<vmem>>, %arg7: memref<128x128xf32, #tpu.memory_space<vmem>>, %arg8: memref<128x128xf32, #tpu.memory_space<vmem>>) attributes {dimension_semantics = [#tpu.dimension_semantics<parallel>, #tpu.dimension_semantics<arbitrary>], iteration_bounds = array<i64: 2, 2>, scalar_prefetch = 0 : i64, scratch_operands = 1 : i64, tpu.core_type = #tpu.core_type<tc>, window_params = [{transform_indices = @transform_0, window_bounds = array<i64: 128, 128>}, {transform_indices = @transform_1, window_bounds = array<i64: 128, 256>}, {transform_indices = @transform_2, window_bounds = array<i64: 1, 256>}, {transform_indices = @transform_3, window_bounds = array<i64: 256, 128>}, {pipeline_mode = #tpu.pipeline_mode<synchronous>, transform_indices = @transform_4, window_bounds = array<i64: 1, 128>}, {transform_indices = @transform_5, window_bounds = array<i64: 128, 128>}]} {
    %c0_i32 = arith.constant 0 : i32
    %0 = arith.cmpi eq, %arg1, %c0_i32 : i32
    %1 = arith.extui %0 : i1 to i32
    %c0_i32_0 = arith.constant 0 : i32
    %2 = arith.cmpi ne, %1, %c0_i32_0 : i32
    scf.if %2 {
      %cst_15 = arith.constant 0.000000e+00 : f32
      %21 = vector.broadcast %cst_15 : f32 to vector<128x128xf32>
      %c0_16 = arith.constant 0 : index
      %c0_17 = arith.constant 0 : index
      %22 = vector.load %arg8[%c0_16, %c0_17] : memref<128x128xf32, #tpu.memory_space<vmem>>, vector<128x128xf32>
      tpu.vector_store %arg8[%c0_16, %c0_17], %21 {strides = array<i32>} : memref<128x128xf32, #tpu.memory_space<vmem>>, vector<128x128xf32>,
    } else {
    }
    %c0 = arith.constant 0 : index
    %c0_1 = arith.constant 0 : index
    %3 = vector.load %arg2[%c0, %c0_1] : memref<128x128xf32, #tpu.memory_space<vmem>>, vector<128x128xf32>
    %4 = arith.truncf %3 : vector<128x128xf32> to vector<128x128xbf16>
    %c0_2 = arith.constant 0 : index
    %c0_3 = arith.constant 0 : index
    %5 = vector.load %arg3[%c0_2, %c0_3] : memref<128x256xbf16, #tpu.memory_space<vmem>>, vector<128x256xbf16>
    %cst = arith.constant dense<0.000000e+00> : vector<128x256xf32>
    %6 = tpu.matmul %4, %5, %cst {dimension_numbers = #tpu.dot_dimension_numbers<[1], [0], [0], [1], [0, 0, 1, 1], [], []>} : vector<128x128xbf16>, vector<128x256xbf16>, vector<128x256xf32> -> vector<128x256xf32>
    %c0_4 = arith.constant 0 : index
    %c0_5 = arith.constant 0 : index
    %7 = vector.load %arg4[%c0_4, %c0_5] : memref<1x256xf32, #tpu.memory_space<vmem>>, vector<1x256xf32>
    %8 = vector.broadcast %7 : vector<1x256xf32> to vector<128x256xf32>
    %9 = arith.addf %6, %8 : vector<128x256xf32>
    %cst_6 = arith.constant 0.000000e+00 : f32
    %10 = vector.broadcast %cst_6 : f32 to vector<128x256xf32>
    %11 = arith.maximumf %9, %10 : vector<128x256xf32>
    %c0_7 = arith.constant 0 : index
    %c0_8 = arith.constant 0 : index
    %12 = vector.load %arg8[%c0_7, %c0_8] : memref<128x128xf32, #tpu.memory_space<vmem>>, vector<128x128xf32>
    %13 = arith.truncf %11 : vector<128x256xf32> to vector<128x256xbf16>
    %c0_9 = arith.constant 0 : index
    %c0_10 = arith.constant 0 : index
    %14 = vector.load %arg5[%c0_9, %c0_10] : memref<256x128xbf16, #tpu.memory_space<vmem>>, vector<256x128xbf16>
    %cst_11 = arith.constant dense<0.000000e+00> : vector<128x128xf32>
    %15 = tpu.matmul %13, %14, %cst_11 {dimension_numbers = #tpu.dot_dimension_numbers<[1], [0], [0], [1], [0, 0, 1, 1], [], []>} : vector<128x256xbf16>, vector<256x128xbf16>, vector<128x128xf32> -> vector<128x128xf32>
    %16 = arith.addf %12, %15 : vector<128x128xf32>
    %c0_12 = arith.constant 0 : index
    %c0_13 = arith.constant 0 : index
    %17 = vector.load %arg8[%c0_12, %c0_13] : memref<128x128xf32, #tpu.memory_space<vmem>>, vector<128x128xf32>
    tpu.vector_store %arg8[%c0_12, %c0_13], %16 {strides = array<i32>} : memref<128x128xf32, #tpu.memory_space<vmem>>, vector<128x128xf32>,
    %c1_i32 = arith.constant 1 : i32
    %18 = arith.cmpi eq, %arg1, %c1_i32 : i32
    %19 = arith.extui %18 : i1 to i32
    %c0_i32_14 = arith.constant 0 : i32
    %20 = arith.cmpi ne, %19, %c0_i32_14 : i32
    scf.if %20 {
      %c0_15 = arith.constant 0 : index
      %c0_16 = arith.constant 0 : index
      %21 = vector.load %arg8[%c0_15, %c0_16] : memref<128x128xf32, #tpu.memory_space<vmem>>, vector<128x128xf32>
      %c0_17 = arith.constant 0 : index
      %c0_18 = arith.constant 0 : index
      %22 = vector.load %arg6[%c0_17, %c0_18] : memref<1x128xf32, #tpu.memory_space<vmem>>, vector<1x128xf32>
      %23 = vector.broadcast %22 : vector<1x128xf32> to vector<128x128xf32>
      %24 = arith.addf %21, %23 : vector<128x128xf32>
      %c0_19 = arith.constant 0 : index
      %c0_20 = arith.constant 0 : index
      %25 = vector.load %arg2[%c0_19, %c0_20] : memref<128x128xf32, #tpu.memory_space<vmem>>, vector<128x128xf32>
      %26 = arith.addf %24, %25 : vector<128x128xf32>
      %c0_21 = arith.constant 0 : index
      %c0_22 = arith.constant 0 : index
      %27 = vector.load %arg7[%c0_21, %c0_22] : memref<128x128xf32, #tpu.memory_space<vmem>>, vector<128x128xf32>
      tpu.vector_store %arg7[%c0_21, %c0_22], %26 {strides = array<i32>} : memref<128x128xf32, #tpu.memory_space<vmem>>, vector<128x128xf32>,
    } else {
    }
    return
  }
  func.func @transform_0(%arg0: i32, %arg1: i32) -> (i32, i32) {
    %c0_i32 = arith.constant 0 : i32
    %c0_i32_0 = arith.constant 0 : i32
    return %arg0, %c0_i32 : i32, i32
  }
  func.func @transform_1(%arg0: i32, %arg1: i32) -> (i32, i32) {
    %c0_i32 = arith.constant 0 : i32
    %c0_i32_0 = arith.constant 0 : i32
    return %c0_i32, %arg1 : i32, i32
  }
  func.func @transform_2(%arg0: i32, %arg1: i32) -> (i32, i32) {
    %c0_i32 = arith.constant 0 : i32
    %c0_i32_0 = arith.constant 0 : i32
    return %c0_i32, %arg1 : i32, i32
  }
  func.func @transform_3(%arg0: i32, %arg1: i32) -> (i32, i32) {
    %c0_i32 = arith.constant 0 : i32
    %c0_i32_0 = arith.constant 0 : i32
    return %arg1, %c0_i32 : i32, i32
  }
  func.func @transform_4(%arg0: i32, %arg1: i32) -> (i32, i32) {
    %c0_i32 = arith.constant 0 : i32
    %c0_i32_0 = arith.constant 0 : i32
    %c0_i32_1 = arith.constant 0 : i32
    return %c0_i32, %c0_i32_0 : i32, i32
  }
  func.func @transform_5(%arg0: i32, %arg1: i32) -> (i32, i32) {
    %c0_i32 = arith.constant 0 : i32
    %c0_i32_0 = arith.constant 0 : i32
    return %arg0, %c0_i32 : i32, i32
  }
}

</mosaic_0001>

<llo_original>
// kernel: tpu_custom_call.1
$region0: #{tpu_custom_call.1}
  #allocation0 [shape = 'u32[]', space=smem, size = 0x4, offset = 0x4, fixed_abs, tag = 'smem constant byte address 0x4 - core index']
  #allocation1 [shape = 'u32[144,128]{1,0:T(1,128)}', space=vmem, size = 0x12000, scoped, tag = 'internal scratch']
  #allocation2 [shape = 'f32[128,128]{1,0:T(8,128)}', space=vmem, size = 0x10000, scoped, tag = 'scratch operand']
  %s0 = inlined_call_operand.hbm [shape: f32[256,128], index: 0, kind: input, shape index: {}]
  %s1 = inlined_call_operand.hbm [shape: bf16[128,512], index: 1, kind: input, shape index: {}]
  %s2 = inlined_call_operand.vmem [shape: f32[1,512], index: 2, kind: input, shape index: {}]
  %s3 = inlined_call_operand.hbm [shape: bf16[512,128], index: 3, kind: input, shape index: {}]
  %s4 = inlined_call_operand.vmem [shape: f32[1,128], index: 4, kind: input, shape index: {}]
  %s5 = inlined_call_operand.hbm [shape: f32[256,128], index: 5, kind: output, shape index: {}]
  %s6 = sld [smem:[#allocation0]]
  $region73: #{tpu_custom_call.1} parent=0
    _
  %s8 = ssub.s32 1, %s6
  %s9 = scalar_select 0, %s8, %s6
  $region1: #{tpu_custom_call.1} parent=0
    #allocation3 [shape = 'u8[131072]{0}', space=vmem, size = 0x20000, scoped, tag = 'input window, operand 0']
    #allocation4 [shape = 's32[2]{0}', space=sflag, size = 0x8, scoped, tag = 'scoped memory for tpu_custom_call.1']
    #allocation5 [shape = 's32[2]{0}', space=sflag, size = 0x8, scoped, tag = 'scoped memory for tpu_custom_call.1']
    #allocation6 [shape = 'u8[131072]{0}', space=vmem, size = 0x20000, scoped, tag = 'input window, operand 1']
    #allocation7 [shape = 's32[2]{0}', space=sflag, size = 0x8, scoped, tag = 'scoped memory for tpu_custom_call.1']
    #allocation8 [shape = 'u8[131072]{0}', space=vmem, size = 0x20000, scoped, tag = 'input window, operand 3']
    #allocation9 [shape = 'u8[131072]{0}', space=vmem, size = 0x20000, scoped, tag = 'output window, operand 0']
    %10 = vsyncpa [#allocation4], 0
    %s11 = scalar_lea.sflag [#allocation4], 1
    %12 = vsyncpa %s11, 0
    %13 = vsyncpa [#allocation7], 0
    %s14 = scalar_lea.sflag [#allocation7], 1
    %15 = vsyncpa %s14, 0
    %16 = vsyncpa [#allocation5], 0
    %s17 = scalar_lea.sflag [#allocation5], 1
    %18 = vsyncpa %s17, 0
    loop: start=0, step=1, limit=6
    $region2: #{tpu_custom_call.1} parent=1 // loop_pre_header
      _
    $region3: #{tpu_custom_call.1} parent=1 // loop_header
      %s20 = sphi 0, %s24
      %p21 = scmp.ge.s32.totalorder %s20, 6
      %s27 = sphi 0, %s39
      %s28 = sphi 0, %s35
      %s29 = sphi 0, %s27
      %s30 = sphi 0, %s28
      %s31 = sphi 0, %s29
      %s32 = sphi 0, %s30
      %s42 = sphi 0, %s44
      %s45 = sphi 0, %s42
      %s46 = sphi 0, %s45
      %s62 = sphi 0, %s46
      %s68 = sphi 0, %s70
      %s71 = sphi 0, %s68
      %s72 = sphi 0, %s71
      %s88 = sphi 0, %s72
      %s94 = sphi 0, %s96
      %s97 = sphi 0, %s94
      %s98 = sphi 0, %s97
      %s114 = sphi 0, %s98
      %s120 = sphi 0, %s122
      %s123 = sphi 0, %s120
      %s124 = sphi 0, %s123
      %s140 = sphi 0, %s124
      %s144 = sphi 0, %s144
      %s146 = sphi 0, %s144
      %s147 = sphi 0, %s146
      %s161 = sphi 0, %s147
      %s167 = sphi 0, %s169
      %s170 = sphi 0, %s167
      %s171 = sphi 0, %s170
      %s187 = sphi 0, %s171
    $region4: #{tpu_custom_call.1} parent=1 // loop_header_branch
      %23 = sbr.rel (%p21) target = $region8
    $region5: #{tpu_custom_call.1} parent=1 // loop_body
      %s25 = ssub.s32 %s20, 1
      %s26 = ssub.s32 %s20, 2
      %s33 = sadd.s32 1, %s28
      %p34 = scmp.ge.s32.totalorder %s33, 2
      %s35 = scalar_select %p34, 0, %s33
      %s36 = sadd.s32 1, %s27
      %s37 = scalar_select %p34, %s36, %s27
      %p38 = scmp.ge.s32.totalorder %s37, 2
      %s39 = scalar_select %p38, 0, %s37
      %s40 = ssub.s32 %s27, %s39
      %p41 = scmp.eq.s32.totalorder %s40, 0
      %s43 = sadd.s32 %s42, 1
      %s44 = scalar_select %p41, %s42, %s43
      %p47 = pneg %p41
      %p48 = scmp.eq.s32.totalorder %s20, 3
      %p49 = por %p47, %p48
      %p50 = scmp.ne.s32.totalorder %s42, %s45
      %p51 = scmp.eq.s32.totalorder %s20, 0
      %p52 = por %p50, %p51
      %p53 = scmp.ne.s32.totalorder %s42, %s45
      %p54 = scmp.eq.s32.totalorder %s25, 3
      %p55 = por %p53, %p54
      %p56 = scmp.ne.s32.totalorder %s45, %s46
      %p57 = scmp.eq.s32.totalorder %s25, 0
      %p58 = por %p56, %p57
      %p59 = scmp.ne.s32.totalorder %s45, %s46
      %p60 = scmp.eq.s32.totalorder %s26, 3
      %p61 = por %p59, %p60
      %p63 = scmp.ne.s32.totalorder %s46, %s62
      %p64 = scmp.eq.s32.totalorder %s26, 0
      %p65 = por %p63, %p64
      %s66 = ssub.s32 %s28, %s35
      %p67 = scmp.eq.s32.totalorder %s66, 0
      %s69 = sadd.s32 %s68, 1
      %s70 = scalar_select %p67, %s68, %s69
      %p73 = pneg %p67
      %p74 = scmp.eq.s32.totalorder %s20, 3
      %p75 = por %p73, %p74
      %p76 = scmp.ne.s32.totalorder %s68, %s71
      %p77 = scmp.eq.s32.totalorder %s20, 0
      %p78 = por %p76, %p77
      %p79 = scmp.ne.s32.totalorder %s68, %s71
      %p80 = scmp.eq.s32.totalorder %s25, 3
      %p81 = por %p79, %p80
      %p82 = scmp.ne.s32.totalorder %s71, %s72
      %p83 = scmp.eq.s32.totalorder %s25, 0
      %p84 = por %p82, %p83
      %p85 = scmp.ne.s32.totalorder %s71, %s72
      %p86 = scmp.eq.s32.totalorder %s26, 3
      %p87 = por %p85, %p86
      %p89 = scmp.ne.s32.totalorder %s72, %s88
      %p90 = scmp.eq.s32.totalorder %s26, 0
      %p91 = por %p89, %p90
      %s92 = ssub.s32 %s28, %s35
      %p93 = scmp.eq.s32.totalorder %s92, 0
      %s95 = sadd.s32 %s94, 1
      %s96 = scalar_select %p93, %s94, %s95
      %p99 = pneg %p93
      %p100 = scmp.eq.s32.totalorder %s20, 3
      %p101 = por %p99, %p100
      %p102 = scmp.ne.s32.totalorder %s94, %s97
      %p103 = scmp.eq.s32.totalorder %s20, 0
      %p104 = por %p102, %p103
      %p105 = scmp.ne.s32.totalorder %s94, %s97
      %p106 = scmp.eq.s32.totalorder %s25, 3
      %p107 = por %p105, %p106
      %p108 = scmp.ne.s32.totalorder %s97, %s98
      %p109 = scmp.eq.s32.totalorder %s25, 0
      %p110 = por %p108, %p109
      %p111 = scmp.ne.s32.totalorder %s97, %s98
      %p112 = scmp.eq.s32.totalorder %s26, 3
      %p113 = por %p111, %p112
      %p115 = scmp.ne.s32.totalorder %s98, %s114
      %p116 = scmp.eq.s32.totalorder %s26, 0
      %p117 = por %p115, %p116
      %s118 = ssub.s32 %s28, %s35
      %p119 = scmp.eq.s32.totalorder %s118, 0
      %s121 = sadd.s32 %s120, 1
      %s122 = scalar_select %p119, %s120, %s121
      %p125 = pneg %p119
      %p126 = scmp.eq.s32.totalorder %s20, 3
      %p127 = por %p125, %p126
      %p128 = scmp.ne.s32.totalorder %s120, %s123
      %p129 = scmp.eq.s32.totalorder %s20, 0
      %p130 = por %p128, %p129
      %p131 = scmp.ne.s32.totalorder %s120, %s123
      %p132 = scmp.eq.s32.totalorder %s25, 3
      %p133 = por %p131, %p132
      %p134 = scmp.ne.s32.totalorder %s123, %s124
      %p135 = scmp.eq.s32.totalorder %s25, 0
      %p136 = por %p134, %p135
      %p137 = scmp.ne.s32.totalorder %s123, %s124
      %p138 = scmp.eq.s32.totalorder %s26, 3
      %p139 = por %p137, %p138
      %p141 = scmp.ne.s32.totalorder %s124, %s140
      %p142 = scmp.eq.s32.totalorder %s26, 0
      %p143 = por %p141, %p142
      %s145 = sadd.s32 %s144, 1
      %p148 = scmp.eq.s32.totalorder %s20, 3
      %p149 = scmp.ne.s32.totalorder %s144, %s146
      %p150 = scmp.eq.s32.totalorder %s20, 0
      %p151 = por %p149, %p150
      %p152 = scmp.ne.s32.totalorder %s144, %s146
      %p153 = scmp.eq.s32.totalorder %s25, 3
      %p154 = por %p152, %p153
      %p155 = scmp.ne.s32.totalorder %s146, %s147
      %p156 = scmp.eq.s32.totalorder %s25, 0
      %p157 = por %p155, %p156
      %p158 = scmp.ne.s32.totalorder %s146, %s147
      %p159 = scmp.eq.s32.totalorder %s26, 3
      %p160 = por %p158, %p159
      %p162 = scmp.ne.s32.totalorder %s147, %s161
      %p163 = scmp.eq.s32.totalorder %s26, 0
      %p164 = por %p162, %p163
      %s165 = ssub.s32 %s27, %s39
      %p166 = scmp.eq.s32.totalorder %s165, 0
      %s168 = sadd.s32 %s167, 1
      %s169 = scalar_select %p166, %s167, %s168
      %p172 = pneg %p166
      %p173 = scmp.eq.s32.totalorder %s20, 3
      %p174 = por %p172, %p173
      %p175 = scmp.ne.s32.totalorder %s167, %s170
      %p176 = scmp.eq.s32.totalorder %s20, 0
      %p177 = por %p175, %p176
      %p178 = scmp.ne.s32.totalorder %s167, %s170
      %p179 = scmp.eq.s32.totalorder %s25, 3
      %p180 = por %p178, %p179
      %p181 = scmp.ne.s32.totalorder %s170, %s171
      %p182 = scmp.eq.s32.totalorder %s25, 0
      %p183 = por %p181, %p182
      %p184 = scmp.ne.s32.totalorder %s170, %s171
      %p185 = scmp.eq.s32.totalorder %s26, 3
      %p186 = por %p184, %p185
      %p188 = scmp.ne.s32.totalorder %s171, %s187
      %p189 = scmp.eq.s32.totalorder %s26, 0
      %p190 = por %p188, %p189
      %p191 = scmp.le.s32.totalorder 1, %s20
      %p192 = scmp.lt.s32.totalorder %s20, 5
      %p193 = pnand %p191, %p192
      %p194 = pneg %p193
      // Predicated region
      $region9: #{tpu_custom_call.1} parent=5 // pred_check
        _
      $region10: #{tpu_custom_call.1} parent=5 // pred_check_branch
        %196 = sbr.rel (%p193) target = $region12
      $region11: #{tpu_custom_call.1} parent=5 // pred_region
        %s197 = ssub.s32 %s20, 1
        // Predicated region
        $region13: #{tpu_custom_call.1} parent=11 // pred_check
          %p198 = pneg %p157
        $region14: #{tpu_custom_call.1} parent=11 // pred_check_branch
          %200 = sbr.rel (%p198) target = $region16
        $region15: #{tpu_custom_call.1} parent=11 // pred_region
          _
        $region16: #{tpu_custom_call.1} parent=11 // pred_fallthru
          _
      $region12: #{tpu_custom_call.1} parent=5 // pred_fallthru
        _
      %p201 = scmp.lt.s32.totalorder %s20, 4
      // Predicated region
      $region17: #{tpu_custom_call.1} parent=5 // pred_check
        %p202 = pneg %p201
      $region18: #{tpu_custom_call.1} parent=5 // pred_check_branch
        %204 = sbr.rel (%p202) target = $region20
      $region19: #{tpu_custom_call.1} parent=5 // pred_region
        // Predicated region
        $region21: #{tpu_custom_call.1} parent=19 // pred_check
          %p205 = pneg %p52
        $region22: #{tpu_custom_call.1} parent=19 // pred_check_branch
          %207 = sbr.rel (%p205) target = $region24
        $region23: #{tpu_custom_call.1} parent=19 // pred_region
          %s208 = sand.u32 %s42, 1
          %s209 = scalar_lea.sflag [#allocation4], %s208
          %s210 = sand.u32 %s42, 1
          %s211 = smul.addr %s210, 128
          %s212 = scalar_lea.vmem [#allocation3], %s211
          %s213 = smul.u32 16, %s27
          %s215 = ssub.s32 2048, 2048
          %216 = vsyncadd %s209, %s215
          %s217 = smul.addr %s213, 128
          %s218 = scalar_lea.hbm %s0, %s217
          %s219 = sshll.u32 %s212, 4
          %s220 = int_to_ptr.vmem [resolvable:$true] %s219
          %225 = dma.hbm_to_vmem [thread:$0]  %s218, 2048, %s220, %s209, 128, 128, 8
        $region24: #{tpu_custom_call.1} parent=19 // pred_fallthru
          _
        // Predicated region
        $region25: #{tpu_custom_call.1} parent=19 // pred_check
          %p226 = pneg %p78
        $region26: #{tpu_custom_call.1} parent=19 // pred_check_branch
          %228 = sbr.rel (%p226) target = $region28
        $region27: #{tpu_custom_call.1} parent=19 // pred_region
          %s229 = sand.u32 %s20, 1
          %s230 = scalar_lea.sflag [#allocation7], %s229
          %s231 = sand.u32 %s68, 1
          %s232 = smul.addr %s231, 128
          %s233 = scalar_lea.vmem [#allocation6], %s232
          %s234 = smul.u32 2, %s28
          %s236 = ssub.s32 2048, 2048
          %237 = vsyncadd %s230, %s236
          %s238 = smul.addr %s234, 64
          %s239 = scalar_lea.hbm %s1, %s238
          %s240 = sshll.u32 %s233, 4
          %s241 = int_to_ptr.vmem [resolvable:$true] %s240
          %246 = dma.hbm_to_vmem [thread:$0]  %s239, 2048, %s241, %s230, 256, 128, 8
        $region28: #{tpu_custom_call.1} parent=19 // pred_fallthru
          _
        // Predicated region
        $region29: #{tpu_custom_call.1} parent=19 // pred_check
          %p247 = pneg %p104
        $region30: #{tpu_custom_call.1} parent=19 // pred_check_branch
          %249 = sbr.rel (%p247) target = $region32
        $region31: #{tpu_custom_call.1} parent=19 // pred_region
          %s250 = smul.u32 2, %s28
          %p251 = scmp.lt.s32.totalorder %s250, 3
          %s252 = scalar_select %p251, %s250, 3
          %s253 = scalar_lea.vmem %s2, %s252
          %s254 = smul.u32 2, %s28
        $region32: #{tpu_custom_call.1} parent=19 // pred_fallthru
          _
        // Predicated region
        $region33: #{tpu_custom_call.1} parent=19 // pred_check
          %p255 = pneg %p130
        $region34: #{tpu_custom_call.1} parent=19 // pred_check_branch
          %257 = sbr.rel (%p255) target = $region36
        $region35: #{tpu_custom_call.1} parent=19 // pred_region
          %s258 = sand.u32 %s20, 1
          %s259 = scalar_lea.sflag [#allocation7], %s258
          %s260 = sand.u32 %s120, 1
          %s261 = smul.addr %s260, 128
          %s262 = scalar_lea.vmem [#allocation8], %s261
          %s263 = smul.u32 32, %s28
          %s265 = ssub.s32 2048, 2048
          %266 = vsyncadd %s259, %s265
          %s267 = smul.addr %s263, 64
          %s268 = scalar_lea.hbm %s3, %s267
          %s269 = sshll.u32 %s262, 4
          %s270 = int_to_ptr.vmem [resolvable:$true] %s269
          %275 = dma.hbm_to_vmem [thread:$0]  %s268, 2048, %s270, %s259, 64, 64, 4
        $region36: #{tpu_custom_call.1} parent=19 // pred_fallthru
          _
      $region20: #{tpu_custom_call.1} parent=5 // pred_fallthru
        _
      %p276 = scmp.le.s32.totalorder 1, %s20
      %p277 = scmp.lt.s32.totalorder %s20, 5
      %p278 = pnand %p276, %p277
      %p279 = pneg %p278
      // Predicated region
      $region37: #{tpu_custom_call.1} parent=5 // pred_check
        _
      $region38: #{tpu_custom_call.1} parent=5 // pred_check_branch
        %281 = sbr.rel (%p278) target = $region40
      $region39: #{tpu_custom_call.1} parent=5 // pred_region
        %s282 = ssub.s32 %s20, 1
        %s283 = sand.u32 %s45, 1
        %s284 = scalar_lea.sflag [#allocation4], %s283
        %s285 = sand.u32 %s45, 1
        %s286 = smul.addr %s285, 128
        %s287 = scalar_lea.vmem [#allocation3], %s286
        // Predicated region
        $region41: #{tpu_custom_call.1} parent=39 // pred_check
          %p288 = pneg %p58
        $region42: #{tpu_custom_call.1} parent=39 // pred_check_branch
          %290 = sbr.rel (%p288) target = $region44
        $region43: #{tpu_custom_call.1} parent=39 // pred_region
          %291 = dma.done %s284, 2048
        $region44: #{tpu_custom_call.1} parent=39 // pred_fallthru
          _
        %s292 = sand.u32 %s25, 1
        %s293 = scalar_lea.sflag [#allocation7], %s292
        %s294 = sand.u32 %s71, 1
        %s295 = smul.addr %s294, 128
        %s296 = scalar_lea.vmem [#allocation6], %s295
        // Predicated region
        $region45: #{tpu_custom_call.1} parent=39 // pred_check
          %p297 = pneg %p84
        $region46: #{tpu_custom_call.1} parent=39 // pred_check_branch
          %299 = sbr.rel (%p297) target = $region48
        $region47: #{tpu_custom_call.1} parent=39 // pred_region
          %300 = dma.done %s293, 2048
        $region48: #{tpu_custom_call.1} parent=39 // pred_fallthru
          _
        %s301 = sand.u32 %s25, 1
        %s302 = scalar_lea.sflag [#allocation7], %s301
        %s303 = sand.u32 %s123, 1
        %s304 = smul.addr %s303, 128
        %s305 = scalar_lea.vmem [#allocation8], %s304
        // Predicated region
        $region49: #{tpu_custom_call.1} parent=39 // pred_check
          %p306 = pneg %p136
        $region50: #{tpu_custom_call.1} parent=39 // pred_check_branch
          %308 = sbr.rel (%p306) target = $region52
        $region51: #{tpu_custom_call.1} parent=39 // pred_region
          %309 = dma.done %s302, 2048
        $region52: #{tpu_custom_call.1} parent=39 // pred_fallthru
          _
        %s310 = sand.u32 %s45, 1
        %s311 = scalar_lea.sflag [#allocation4], %s310
        %s312 = sand.u32 %s45, 1
        %s313 = smul.addr %s312, 128
        %s314 = scalar_lea.vmem [#allocation3], %s313
        %p315 = pneg %p58
        %p316 = pneg %p55
        %s317 = sand.u32 %s25, 1
        %s318 = scalar_lea.sflag [#allocation7], %s317
        %s319 = sand.u32 %s71, 1
        %s320 = smul.addr %s319, 128
        %s321 = scalar_lea.vmem [#allocation6], %s320
        %p322 = pneg %p84
        %p323 = pneg %p81
        %s324 = smul.u32 2, %s30
        %p325 = scmp.lt.s32.totalorder %s324, 3
        %s326 = scalar_select %p325, %s324, 3
        %s327 = scalar_lea.vmem %s2, %s326
        %p328 = pneg %p110
        %p329 = pneg %p107
        %s330 = sand.u32 %s25, 1
        %s331 = scalar_lea.sflag [#allocation7], %s330
        %s332 = sand.u32 %s123, 1
        %s333 = smul.addr %s332, 128
        %s334 = scalar_lea.vmem [#allocation8], %s333
        %p335 = pneg %p136
        %p336 = pneg %p133
        %p337 = pneg %p157
        %p338 = pneg %p154
        %p339 = pneg %p183
        %p340 = pneg %p180
        %s341 = sand.u32 %s170, 1
        %s342 = scalar_lea.sflag [#allocation5], %s341
        %s343 = sand.u32 %s170, 1
        %s344 = smul.addr %s343, 128
        %s345 = scalar_lea.vmem [#allocation9], %s344
        %s346 = smul.u32 16, %s29
        %s347 = smul.u32 2, %s30
        %s348 = smul.u32 2, %s30
        %p349 = scmp.lt.s32.totalorder %s348, 3
        %s350 = scalar_select %p349, %s348, 3
        %s351 = scalar_lea.vmem %s2, %s350
        %s352 = smul.u32 2, %s30
        %s353 = smul.u32 32, %s30
        %s354 = smul.u32 16, %s29
        %p356 = scmp.eq.s32.totalorder %s30, 0
        // Predicated region
        $region53: #{tpu_custom_call.1} parent=39 // pred_check
          %p357 = pneg %p356
        $region54: #{tpu_custom_call.1} parent=39 // pred_check_branch
          %359 = sbr.rel (%p357) target = $region56
        $region55: #{tpu_custom_call.1} parent=39 // pred_region
          %360 = vst [vmem:[#allocation2] sm:$0xff] 0.0
          %361 = vst [vmem:[#allocation2 + $0x8] sm:$0xff] 0.0
          %362 = vst [vmem:[#allocation2 + $0x10] sm:$0xff] 0.0
          %363 = vst [vmem:[#allocation2 + $0x18] sm:$0xff] 0.0
          %364 = vst [vmem:[#allocation2 + $0x20] sm:$0xff] 0.0
          %365 = vst [vmem:[#allocation2 + $0x28] sm:$0xff] 0.0
          %366 = vst [vmem:[#allocation2 + $0x30] sm:$0xff] 0.0
          %367 = vst [vmem:[#allocation2 + $0x38] sm:$0xff] 0.0
          %368 = vst [vmem:[#allocation2 + $0x40] sm:$0xff] 0.0
          %369 = vst [vmem:[#allocation2 + $0x48] sm:$0xff] 0.0
          %370 = vst [vmem:[#allocation2 + $0x50] sm:$0xff] 0.0
          %371 = vst [vmem:[#allocation2 + $0x58] sm:$0xff] 0.0
          %372 = vst [vmem:[#allocation2 + $0x60] sm:$0xff] 0.0
          %373 = vst [vmem:[#allocation2 + $0x68] sm:$0xff] 0.0
          %374 = vst [vmem:[#allocation2 + $0x70] sm:$0xff] 0.0
          %375 = vst [vmem:[#allocation2 + $0x78] sm:$0xff] 0.0
        $region56: #{tpu_custom_call.1} parent=39 // pred_fallthru
          _
        %v376 = vld [vmem:[%s287] sm:$0xff]
        %v377 = vld [vmem:[%s287 + $0x8] sm:$0xff]
        %v378 = vld [vmem:[%s287 + $0x10] sm:$0xff]
        %v379 = vld [vmem:[%s287 + $0x18] sm:$0xff]
        %v380 = vld [vmem:[%s287 + $0x20] sm:$0xff]
        %v381 = vld [vmem:[%s287 + $0x28] sm:$0xff]
        %v382 = vld [vmem:[%s287 + $0x30] sm:$0xff]
        %v383 = vld [vmem:[%s287 + $0x38] sm:$0xff]
        %v384 = vld [vmem:[%s287 + $0x40] sm:$0xff]
        %v385 = vld [vmem:[%s287 + $0x48] sm:$0xff]
        %v386 = vld [vmem:[%s287 + $0x50] sm:$0xff]
        %v387 = vld [vmem:[%s287 + $0x58] sm:$0xff]
        %v388 = vld [vmem:[%s287 + $0x60] sm:$0xff]
        %v389 = vld [vmem:[%s287 + $0x68] sm:$0xff]
        %v390 = vld [vmem:[%s287 + $0x70] sm:$0xff]
        %v391 = vld [vmem:[%s287 + $0x78] sm:$0xff]
        %v392 = vpack.c.bf16 %v377, %v376
        %v393 = vpack.c.bf16 %v379, %v378
        %v394 = vpack.c.bf16 %v381, %v380
        %v395 = vpack.c.bf16 %v383, %v382
        %v396 = vpack.c.bf16 %v385, %v384
        %v397 = vpack.c.bf16 %v387, %v386
        %v398 = vpack.c.bf16 %v389, %v388
        %v399 = vpack.c.bf16 %v391, %v390
        %v400 = vld [vmem:[%s296] sm:$0xff]
        %v401 = vld [vmem:[%s296 + $0x8] sm:$0xff]
        %v402 = vld [vmem:[%s296 + $0x10] sm:$0xff]
        %v403 = vld [vmem:[%s296 + $0x18] sm:$0xff]
        %v404 = vld [vmem:[%s296 + $0x20] sm:$0xff]
        %v405 = vld [vmem:[%s296 + $0x28] sm:$0xff]
        %v406 = vld [vmem:[%s296 + $0x30] sm:$0xff]
        %v407 = vld [vmem:[%s296 + $0x38] sm:$0xff]
        %v408 = vld [vmem:[%s296 + $0x40] sm:$0xff]
        %v409 = vld [vmem:[%s296 + $0x48] sm:$0xff]
        %v410 = vld [vmem:[%s296 + $0x50] sm:$0xff]
        %v411 = vld [vmem:[%s296 + $0x58] sm:$0xff]
        %v412 = vld [vmem:[%s296 + $0x60] sm:$0xff]
        %v413 = vld [vmem:[%s296 + $0x68] sm:$0xff]
        %v414 = vld [vmem:[%s296 + $0x70] sm:$0xff]
        %v415 = vld [vmem:[%s296 + $0x78] sm:$0xff]
        %v416 = vld [vmem:[%s351] sm:$0x3]
        %v418 = vlaneseq
        %v419 = vshrl.u32 %v418, 7
        %v420 = vsub.s32 0, %v419
        %v421 = vrot.slane %v416, %v420
        %v422 = vlaneseq
        %v423 = vshrl.u32 %v422, 7
        %v424 = vsub.s32 1, %v423
        %v425 = vrot.slane %v416, %v424
        %v444 = vunpack.c.l.b16 %v400
        %v445 = vunpack.c.h.b16 %v400
        %v446 = vunpack.c.l.b16 %v401
        %v447 = vunpack.c.h.b16 %v401
        %v448 = vunpack.c.l.b16 %v402
        %v449 = vunpack.c.h.b16 %v402
        %v450 = vunpack.c.l.b16 %v403
        %v451 = vunpack.c.h.b16 %v403
        %v452 = vunpack.c.l.b16 %v404
        %v453 = vunpack.c.h.b16 %v404
        %v454 = vunpack.c.l.b16 %v405
        %v455 = vunpack.c.h.b16 %v405
        %v456 = vunpack.c.l.b16 %v406
        %v457 = vunpack.c.h.b16 %v406
        %v458 = vunpack.c.l.b16 %v407
        %v459 = vunpack.c.h.b16 %v407
        %v460 = vunpack.c.l.b16 %v408
        %v461 = vunpack.c.h.b16 %v408
        %v462 = vunpack.c.l.b16 %v409
        %v463 = vunpack.c.h.b16 %v409
        %v464 = vunpack.c.l.b16 %v410
        %v465 = vunpack.c.h.b16 %v410
        %v466 = vunpack.c.l.b16 %v411
        %v467 = vunpack.c.h.b16 %v411
        %v468 = vunpack.c.l.b16 %v412
        %v469 = vunpack.c.h.b16 %v412
        %v470 = vunpack.c.l.b16 %v413
        %v471 = vunpack.c.h.b16 %v413
        %v472 = vunpack.c.l.b16 %v414
        %v473 = vunpack.c.h.b16 %v414
        %v474 = vunpack.c.l.b16 %v415
        %v475 = vunpack.c.h.b16 %v415
        %v476 = vpack.c.b16 %v446, %v444
        %v477 = vpack.c.b16 %v447, %v445
        %v478 = vpack.c.b16 %v450, %v448
        %v479 = vpack.c.b16 %v451, %v449
        %v480 = vpack.c.b16 %v454, %v452
        %v481 = vpack.c.b16 %v455, %v453
        %v482 = vpack.c.b16 %v458, %v456
        %v483 = vpack.c.b16 %v459, %v457
        %v484 = vpack.c.b16 %v462, %v460
        %v485 = vpack.c.b16 %v463, %v461
        %v486 = vpack.c.b16 %v466, %v464
        %v487 = vpack.c.b16 %v467, %v465
        %v488 = vpack.c.b16 %v470, %v468
        %v489 = vpack.c.b16 %v471, %v469
        %v490 = vpack.c.b16 %v474, %v472
        %v491 = vpack.c.b16 %v475, %v473
        %508 = vmatprep.subr.bf16.mxu0 %v477
        %509 = vmatpush1.bf16.msra.mxu0 %v476
        %510 = vmatprep.subr.bf16.mxu0 %v479
        %511 = vmatpush1.bf16.msra.mxu0 %v478
        %512 = vmatprep.subr.bf16.mxu0 %v481
        %513 = vmatpush1.bf16.msra.mxu0 %v480
        %514 = vmatprep.subr.bf16.mxu0 %v483
        %515 = vmatpush1.bf16.msra.mxu0 %v482
        %516 = vmatprep.subr.bf16.mxu0 %v485
        %517 = vmatpush1.bf16.msra.mxu0 %v484
        %518 = vmatprep.subr.bf16.mxu0 %v487
        %519 = vmatpush1.bf16.msra.mxu0 %v486
        %520 = vmatprep.subr.bf16.mxu0 %v489
        %521 = vmatpush1.bf16.msra.mxu0 %v488
        %522 = vmatprep.subr.bf16.mxu0 %v491
        %523 = vmatpush1.bf16.msra.mxu0 %v490
        %524 = vmatprep.subr.bf16.mxu0 0
        %525 = vmatpush1.bf16.msra.mxu0 0
        %526 = vmatprep.subr.bf16.mxu0 0
        %527 = vmatpush1.bf16.msra.mxu0 0
        %528 = vmatprep.subr.bf16.mxu0 0
        %529 = vmatpush1.bf16.msra.mxu0 0
        %530 = vmatprep.subr.bf16.mxu0 0
        %531 = vmatpush1.bf16.msra.mxu0 0
        %532 = vmatprep.subr.bf16.mxu0 0
        %533 = vmatpush1.bf16.msra.mxu0 0
        %534 = vmatprep.subr.bf16.mxu0 0
        %535 = vmatpush1.bf16.msra.mxu0 0
        %536 = vmatprep.subr.bf16.mxu0 0
        %537 = vmatpush1.bf16.msra.mxu0 0
        %538 = vmatprep.subr.bf16.mxu0 0
        %539 = vmatpush1.bf16.msra.mxu0 0
        %540 = vmatprep.mubr.bf16.mxu0 0
        %541 = vmatmul.mubr.bf16.gmra.mrb[0].mxu0 %v392
        %v542 = vpop.f32.mrb[0].mxu0
        %v543 = vadd.f32 %v421, %v542
        %v544 = vpop.f32.mrb[0].mxu0
        %v545 = vadd.f32 %v425, %v544
        %v546 = vpop.f32.mrb[0].mxu0
        %v547 = vadd.f32 %v421, %v546
        %v548 = vpop.f32.mrb[0].mxu0
        %v549 = vadd.f32 %v425, %v548
        %550 = vmatprep.mubr.bf16.mxu0 0
        %551 = vmatmul.mubr.bf16.gmra.mrb[0].mxu0 %v393
        %v552 = vpop.f32.mrb[0].mxu0
        %v553 = vadd.f32 %v421, %v552
        %v554 = vpop.f32.mrb[0].mxu0
        %v555 = vadd.f32 %v425, %v554
        %v556 = vpop.f32.mrb[0].mxu0
        %v557 = vadd.f32 %v421, %v556
        %v558 = vpop.f32.mrb[0].mxu0
        %v559 = vadd.f32 %v425, %v558
        %560 = vmatprep.mubr.bf16.mxu0 0
        %561 = vmatmul.mubr.bf16.gmra.mrb[0].mxu0 %v394
        %v562 = vpop.f32.mrb[0].mxu0
        %v563 = vadd.f32 %v421, %v562
        %v564 = vpop.f32.mrb[0].mxu0
        %v565 = vadd.f32 %v425, %v564
        %v566 = vpop.f32.mrb[0].mxu0
        %v567 = vadd.f32 %v421, %v566
        %v568 = vpop.f32.mrb[0].mxu0
        %v569 = vadd.f32 %v425, %v568
        %570 = vmatprep.mubr.bf16.mxu0 0
        %571 = vmatmul.mubr.bf16.gmra.mrb[0].mxu0 %v395
        %v572 = vpop.f32.mrb[0].mxu0
        %v573 = vadd.f32 %v421, %v572
        %v574 = vpop.f32.mrb[0].mxu0
        %v575 = vadd.f32 %v425, %v574
        %v576 = vpop.f32.mrb[0].mxu0
        %v577 = vadd.f32 %v421, %v576
        %v578 = vpop.f32.mrb[0].mxu0
        %v579 = vadd.f32 %v425, %v578
        %580 = vmatprep.mubr.bf16.mxu0 0
        %581 = vmatmul.mubr.bf16.gmra.mrb[0].mxu0 %v396
        %v582 = vpop.f32.mrb[0].mxu0
        %v583 = vadd.f32 %v421, %v582
        %v584 = vpop.f32.mrb[0].mxu0
        %v585 = vadd.f32 %v425, %v584
        %v586 = vpop.f32.mrb[0].mxu0
        %v587 = vadd.f32 %v421, %v586
        %v588 = vpop.f32.mrb[0].mxu0
        %v589 = vadd.f32 %v425, %v588
        %590 = vmatprep.mubr.bf16.mxu0 0
        %591 = vmatmul.mubr.bf16.gmra.mrb[0].mxu0 %v397
        %v592 = vpop.f32.mrb[0].mxu0
        %v593 = vadd.f32 %v421, %v592
        %v594 = vpop.f32.mrb[0].mxu0
        %v595 = vadd.f32 %v425, %v594
        %v596 = vpop.f32.mrb[0].mxu0
        %v597 = vadd.f32 %v421, %v596
        %v598 = vpop.f32.mrb[0].mxu0
        %v599 = vadd.f32 %v425, %v598
        %600 = vmatprep.mubr.bf16.mxu0 0
        %601 = vmatmul.mubr.bf16.gmra.mrb[0].mxu0 %v398
        %v602 = vpop.f32.mrb[0].mxu0
        %v603 = vadd.f32 %v421, %v602
        %v604 = vpop.f32.mrb[0].mxu0
        %v605 = vadd.f32 %v425, %v604
        %v606 = vpop.f32.mrb[0].mxu0
        %v607 = vadd.f32 %v421, %v606
        %v608 = vpop.f32.mrb[0].mxu0
        %v609 = vadd.f32 %v425, %v608
        %610 = vmatprep.mubr.bf16.mxu0 0
        %611 = vmatmul.mubr.bf16.gmra.mrb[0].mxu0 %v399
        %v612 = vpop.f32.mrb[0].mxu0
        %v613 = vadd.f32 %v421, %v612
        %v614 = vpop.f32.mrb[0].mxu0
        %v615 = vadd.f32 %v425, %v614
        %v616 = vpop.f32.mrb[0].mxu0
        %v617 = vadd.f32 %v421, %v616
        %v618 = vpop.f32.mrb[0].mxu0
        %v619 = vadd.f32 %v425, %v618
        %620 = vdwg.mxu0
        %v621 = vmax.f32 %v543, 0.0
        %v622 = vmax.f32 %v545, 0.0
        %v623 = vmax.f32 %v547, 0.0
        %v624 = vmax.f32 %v549, 0.0
        %v625 = vmax.f32 %v553, 0.0
        %v626 = vmax.f32 %v555, 0.0
        %v627 = vmax.f32 %v557, 0.0
        %v628 = vmax.f32 %v559, 0.0
        %v629 = vmax.f32 %v563, 0.0
        %v630 = vmax.f32 %v565, 0.0
        %v631 = vmax.f32 %v567, 0.0
        %v632 = vmax.f32 %v569, 0.0
        %v633 = vmax.f32 %v573, 0.0
        %v634 = vmax.f32 %v575, 0.0
        %v635 = vmax.f32 %v577, 0.0
        %v636 = vmax.f32 %v579, 0.0
        %v637 = vmax.f32 %v583, 0.0
        %v638 = vmax.f32 %v585, 0.0
        %v639 = vmax.f32 %v587, 0.0
        %v640 = vmax.f32 %v589, 0.0
        %v641 = vmax.f32 %v593, 0.0
        %v642 = vmax.f32 %v595, 0.0
        %v643 = vmax.f32 %v597, 0.0
        %v644 = vmax.f32 %v599, 0.0
        %v645 = vmax.f32 %v603, 0.0
        %v646 = vmax.f32 %v605, 0.0
        %v647 = vmax.f32 %v607, 0.0
        %v648 = vmax.f32 %v609, 0.0
        %v649 = vmax.f32 %v613, 0.0
        %v650 = vmax.f32 %v615, 0.0
        %v651 = vmax.f32 %v617, 0.0
        %v652 = vmax.f32 %v619, 0.0
        %v653 = vld [vmem:[#allocation2] sm:$0xff]
        %v654 = vld [vmem:[#allocation2 + $0x8] sm:$0xff]
        %v655 = vld [vmem:[#allocation2 + $0x10] sm:$0xff]
        %v656 = vld [vmem:[#allocation2 + $0x18] sm:$0xff]
        %v657 = vld [vmem:[#allocation2 + $0x20] sm:$0xff]
        %v658 = vld [vmem:[#allocation2 + $0x28] sm:$0xff]
        %v659 = vld [vmem:[#allocation2 + $0x30] sm:$0xff]
        %v660 = vld [vmem:[#allocation2 + $0x38] sm:$0xff]
        %v661 = vld [vmem:[#allocation2 + $0x40] sm:$0xff]
        %v662 = vld [vmem:[#allocation2 + $0x48] sm:$0xff]
        %v663 = vld [vmem:[#allocation2 + $0x50] sm:$0xff]
        %v664 = vld [vmem:[#allocation2 + $0x58] sm:$0xff]
        %v665 = vld [vmem:[#allocation2 + $0x60] sm:$0xff]
        %v666 = vld [vmem:[#allocation2 + $0x68] sm:$0xff]
        %v667 = vld [vmem:[#allocation2 + $0x70] sm:$0xff]
        %v668 = vld [vmem:[#allocation2 + $0x78] sm:$0xff]
        %v669 = vpack.c.bf16 %v623, %v621
        %v670 = vpack.c.bf16 %v624, %v622
        %v671 = vpack.c.bf16 %v627, %v625
        %v672 = vpack.c.bf16 %v628, %v626
        %v673 = vpack.c.bf16 %v631, %v629
        %v674 = vpack.c.bf16 %v632, %v630
        %v675 = vpack.c.bf16 %v635, %v633
        %v676 = vpack.c.bf16 %v636, %v634
        %v677 = vpack.c.bf16 %v639, %v637
        %v678 = vpack.c.bf16 %v640, %v638
        %v679 = vpack.c.bf16 %v643, %v641
        %v680 = vpack.c.bf16 %v644, %v642
        %v681 = vpack.c.bf16 %v647, %v645
        %v682 = vpack.c.bf16 %v648, %v646
        %v683 = vpack.c.bf16 %v651, %v649
        %v684 = vpack.c.bf16 %v652, %v650
        %v685 = vld [vmem:[%s305] sm:$0xf]
        %v686 = vld [vmem:[%s305 + $0x4] sm:$0xf]
        %v687 = vld [vmem:[%s305 + $0x8] sm:$0xf]
        %v688 = vld [vmem:[%s305 + $0xc] sm:$0xf]
        %v689 = vld [vmem:[%s305 + $0x10] sm:$0xf]
        %v690 = vld [vmem:[%s305 + $0x14] sm:$0xf]
        %v691 = vld [vmem:[%s305 + $0x18] sm:$0xf]
        %v692 = vld [vmem:[%s305 + $0x1c] sm:$0xf]
        %v693 = vld [vmem:[%s305 + $0x20] sm:$0xf]
        %v694 = vld [vmem:[%s305 + $0x24] sm:$0xf]
        %v695 = vld [vmem:[%s305 + $0x28] sm:$0xf]
        %v696 = vld [vmem:[%s305 + $0x2c] sm:$0xf]
        %v697 = vld [vmem:[%s305 + $0x30] sm:$0xf]
        %v698 = vld [vmem:[%s305 + $0x34] sm:$0xf]
        %v699 = vld [vmem:[%s305 + $0x38] sm:$0xf]
        %v700 = vld [vmem:[%s305 + $0x3c] sm:$0xf]
        %v701 = vld [vmem:[%s305 + $0x40] sm:$0xf]
        %v702 = vld [vmem:[%s305 + $0x44] sm:$0xf]
        %v703 = vld [vmem:[%s305 + $0x48] sm:$0xf]
        %v704 = vld [vmem:[%s305 + $0x4c] sm:$0xf]
        %v705 = vld [vmem:[%s305 + $0x50] sm:$0xf]
        %v706 = vld [vmem:[%s305 + $0x54] sm:$0xf]
        %v707 = vld [vmem:[%s305 + $0x58] sm:$0xf]
        %v708 = vld [vmem:[%s305 + $0x5c] sm:$0xf]
        %v709 = vld [vmem:[%s305 + $0x60] sm:$0xf]
        %v710 = vld [vmem:[%s305 + $0x64] sm:$0xf]
        %v711 = vld [vmem:[%s305 + $0x68] sm:$0xf]
        %v712 = vld [vmem:[%s305 + $0x6c] sm:$0xf]
        %v713 = vld [vmem:[%s305 + $0x70] sm:$0xf]
        %v714 = vld [vmem:[%s305 + $0x74] sm:$0xf]
        %v715 = vld [vmem:[%s305 + $0x78] sm:$0xf]
        %v716 = vld [vmem:[%s305 + $0x7c] sm:$0xf]
        %v749 = vunpack.c.l.b16 %v685
        %v750 = vunpack.c.l.b16 %v686
        %v751 = vunpack.c.l.b16 %v687
        %v752 = vunpack.c.l.b16 %v688
        %v753 = vunpack.c.l.b16 %v689
        %v754 = vunpack.c.l.b16 %v690
        %v755 = vunpack.c.l.b16 %v691
        %v756 = vunpack.c.l.b16 %v692
        %v757 = vunpack.c.l.b16 %v693
        %v758 = vunpack.c.l.b16 %v694
        %v759 = vunpack.c.l.b16 %v695
        %v760 = vunpack.c.l.b16 %v696
        %v761 = vunpack.c.l.b16 %v697
        %v762 = vunpack.c.l.b16 %v698
        %v763 = vunpack.c.l.b16 %v699
        %v764 = vunpack.c.l.b16 %v700
        %v765 = vunpack.c.l.b16 %v701
        %v766 = vunpack.c.l.b16 %v702
        %v767 = vunpack.c.l.b16 %v703
        %v768 = vunpack.c.l.b16 %v704
        %v769 = vunpack.c.l.b16 %v705
        %v770 = vunpack.c.l.b16 %v706
        %v771 = vunpack.c.l.b16 %v707
        %v772 = vunpack.c.l.b16 %v708
        %v773 = vunpack.c.l.b16 %v709
        %v774 = vunpack.c.l.b16 %v710
        %v775 = vunpack.c.l.b16 %v711
        %v776 = vunpack.c.l.b16 %v712
        %v777 = vunpack.c.l.b16 %v713
        %v778 = vunpack.c.l.b16 %v714
        %v779 = vunpack.c.l.b16 %v715
        %v780 = vunpack.c.l.b16 %v716
        %v781 = vpack.c.b16 %v750, %v749
        %v782 = vpack.c.b16 %v752, %v751
        %v783 = vpack.c.b16 %v754, %v753
        %v784 = vpack.c.b16 %v756, %v755
        %v785 = vpack.c.b16 %v758, %v757
        %v786 = vpack.c.b16 %v760, %v759
        %v787 = vpack.c.b16 %v762, %v761
        %v788 = vpack.c.b16 %v764, %v763
        %v789 = vpack.c.b16 %v766, %v765
        %v790 = vpack.c.b16 %v768, %v767
        %v791 = vpack.c.b16 %v770, %v769
        %v792 = vpack.c.b16 %v772, %v771
        %v793 = vpack.c.b16 %v774, %v773
        %v794 = vpack.c.b16 %v776, %v775
        %v795 = vpack.c.b16 %v778, %v777
        %v796 = vpack.c.b16 %v780, %v779
        %813 = vmatprep.subr.bf16.mxu0 0
        %814 = vmatpush1.bf16.msra.mxu0 %v781
        %815 = vmatprep.subr.bf16.mxu0 0
        %816 = vmatpush1.bf16.msra.mxu0 %v782
        %817 = vmatprep.subr.bf16.mxu0 0
        %818 = vmatpush1.bf16.msra.mxu0 %v783
        %819 = vmatprep.subr.bf16.mxu0 0
        %820 = vmatpush1.bf16.msra.mxu0 %v784
        %821 = vmatprep.subr.bf16.mxu0 0
        %822 = vmatpush1.bf16.msra.mxu0 %v785
        %823 = vmatprep.subr.bf16.mxu0 0
        %824 = vmatpush1.bf16.msra.mxu0 %v786
        %825 = vmatprep.subr.bf16.mxu0 0
        %826 = vmatpush1.bf16.msra.mxu0 %v787
        %827 = vmatprep.subr.bf16.mxu0 0
        %828 = vmatpush1.bf16.msra.mxu0 %v788
        %829 = vmatprep.subr.bf16.mxu0 0
        %830 = vmatpush1.bf16.msra.mxu0 %v789
        %831 = vmatprep.subr.bf16.mxu0 0
        %832 = vmatpush1.bf16.msra.mxu0 %v790
        %833 = vmatprep.subr.bf16.mxu0 0
        %834 = vmatpush1.bf16.msra.mxu0 %v791
        %835 = vmatprep.subr.bf16.mxu0 0
        %836 = vmatpush1.bf16.msra.mxu0 %v792
        %837 = vmatprep.subr.bf16.mxu0 0
        %838 = vmatpush1.bf16.msra.mxu0 %v793
        %839 = vmatprep.subr.bf16.mxu0 0
        %840 = vmatpush1.bf16.msra.mxu0 %v794
        %841 = vmatprep.subr.bf16.mxu0 0
        %842 = vmatpush1.bf16.msra.mxu0 %v795
        %843 = vmatprep.subr.bf16.mxu0 0
        %844 = vmatpush1.bf16.msra.mxu0 %v796
        %845 = vmatprep.mubr.bf16.mxu0 %v670
        %846 = vmatmul.mubr.bf16.gmra.mrb[0].mxu0 %v669
        %v847 = vpop.f32.mrb[0].mxu0
        %v848 = vadd.f32 0.0, %v847
        %v849 = vpop.f32.mrb[0].mxu0
        %v850 = vpop.f32.mrb[0].mxu0
        %v851 = vadd.f32 0.0, %v850
        %v852 = vpop.f32.mrb[0].mxu0
        %853 = vmatprep.mubr.bf16.mxu0 %v672
        %854 = vmatmul.mubr.bf16.gmra.mrb[0].mxu0 %v671
        %v855 = vpop.f32.mrb[0].mxu0
        %v856 = vadd.f32 0.0, %v855
        %v857 = vpop.f32.mrb[0].mxu0
        %v858 = vpop.f32.mrb[0].mxu0
        %v859 = vadd.f32 0.0, %v858
        %v860 = vpop.f32.mrb[0].mxu0
        %861 = vmatprep.mubr.bf16.mxu0 %v674
        %862 = vmatmul.mubr.bf16.gmra.mrb[0].mxu0 %v673
        %v863 = vpop.f32.mrb[0].mxu0
        %v864 = vadd.f32 0.0, %v863
        %v865 = vpop.f32.mrb[0].mxu0
        %v866 = vpop.f32.mrb[0].mxu0
        %v867 = vadd.f32 0.0, %v866
        %v868 = vpop.f32.mrb[0].mxu0
        %869 = vmatprep.mubr.bf16.mxu0 %v676
        %870 = vmatmul.mubr.bf16.gmra.mrb[0].mxu0 %v675
        %v871 = vpop.f32.mrb[0].mxu0
        %v872 = vadd.f32 0.0, %v871
        %v873 = vpop.f32.mrb[0].mxu0
        %v874 = vpop.f32.mrb[0].mxu0
        %v875 = vadd.f32 0.0, %v874
        %v876 = vpop.f32.mrb[0].mxu0
        %877 = vmatprep.mubr.bf16.mxu0 %v678
        %878 = vmatmul.mubr.bf16.gmra.mrb[0].mxu0 %v677
        %v879 = vpop.f32.mrb[0].mxu0
        %v880 = vadd.f32 0.0, %v879
        %v881 = vpop.f32.mrb[0].mxu0
        %v882 = vpop.f32.mrb[0].mxu0
        %v883 = vadd.f32 0.0, %v882
        %v884 = vpop.f32.mrb[0].mxu0
        %885 = vmatprep.mubr.bf16.mxu0 %v680
        %886 = vmatmul.mubr.bf16.gmra.mrb[0].mxu0 %v679
        %v887 = vpop.f32.mrb[0].mxu0
        %v888 = vadd.f32 0.0, %v887
        %v889 = vpop.f32.mrb[0].mxu0
        %v890 = vpop.f32.mrb[0].mxu0
        %v891 = vadd.f32 0.0, %v890
        %v892 = vpop.f32.mrb[0].mxu0
        %893 = vmatprep.mubr.bf16.mxu0 %v682
        %894 = vmatmul.mubr.bf16.gmra.mrb[0].mxu0 %v681
        %v895 = vpop.f32.mrb[0].mxu0
        %v896 = vadd.f32 0.0, %v895
        %v897 = vpop.f32.mrb[0].mxu0
        %v898 = vpop.f32.mrb[0].mxu0
        %v899 = vadd.f32 0.0, %v898
        %v900 = vpop.f32.mrb[0].mxu0
        %901 = vmatprep.mubr.bf16.mxu0 %v684
        %902 = vmatmul.mubr.bf16.gmra.mrb[0].mxu0 %v683
        %v903 = vpop.f32.mrb[0].mxu0
        %v904 = vadd.f32 0.0, %v903
        %v905 = vpop.f32.mrb[0].mxu0
        %v906 = vpop.f32.mrb[0].mxu0
        %v907 = vadd.f32 0.0, %v906
        %v908 = vpop.f32.mrb[0].mxu0
        %909 = vdwg.mxu0
        %v910 = vadd.f32 %v653, %v848
        %v911 = vadd.f32 %v654, %v851
        %v912 = vadd.f32 %v655, %v856
        %v913 = vadd.f32 %v656, %v859
        %v914 = vadd.f32 %v657, %v864
        %v915 = vadd.f32 %v658, %v867
        %v916 = vadd.f32 %v659, %v872
        %v917 = vadd.f32 %v660, %v875
        %v918 = vadd.f32 %v661, %v880
        %v919 = vadd.f32 %v662, %v883
        %v920 = vadd.f32 %v663, %v888
        %v921 = vadd.f32 %v664, %v891
        %v922 = vadd.f32 %v665, %v896
        %v923 = vadd.f32 %v666, %v899
        %v924 = vadd.f32 %v667, %v904
        %v925 = vadd.f32 %v668, %v907
        %926 = vst [vmem:[#allocation2] sm:$0xff] %v910
        %927 = vst [vmem:[#allocation2 + $0x8] sm:$0xff] %v911
        %928 = vst [vmem:[#allocation2 + $0x10] sm:$0xff] %v912
        %929 = vst [vmem:[#allocation2 + $0x18] sm:$0xff] %v913
        %930 = vst [vmem:[#allocation2 + $0x20] sm:$0xff] %v914
        %931 = vst [vmem:[#allocation2 + $0x28] sm:$0xff] %v915
        %932 = vst [vmem:[#allocation2 + $0x30] sm:$0xff] %v916
        %933 = vst [vmem:[#allocation2 + $0x38] sm:$0xff] %v917
        %934 = vst [vmem:[#allocation2 + $0x40] sm:$0xff] %v918
        %935 = vst [vmem:[#allocation2 + $0x48] sm:$0xff] %v919
        %936 = vst [vmem:[#allocation2 + $0x50] sm:$0xff] %v920
        %937 = vst [vmem:[#allocation2 + $0x58] sm:$0xff] %v921
        %938 = vst [vmem:[#allocation2 + $0x60] sm:$0xff] %v922
        %939 = vst [vmem:[#allocation2 + $0x68] sm:$0xff] %v923
        %940 = vst [vmem:[#allocation2 + $0x70] sm:$0xff] %v924
        %941 = vst [vmem:[#allocation2 + $0x78] sm:$0xff] %v925
        %p942 = scmp.eq.s32.totalorder %s30, 1
        // Predicated region
        $region57: #{tpu_custom_call.1} parent=39 // pred_check
          %p943 = pneg %p942
        $region58: #{tpu_custom_call.1} parent=39 // pred_check_branch
          %945 = sbr.rel (%p943) target = $region60
        $region59: #{tpu_custom_call.1} parent=39 // pred_region
          %v946 = vld [vmem:[#allocation2] sm:$0xff]
          %v947 = vld [vmem:[#allocation2 + $0x8] sm:$0xff]
          %v948 = vld [vmem:[#allocation2 + $0x10] sm:$0xff]
          %v949 = vld [vmem:[#allocation2 + $0x18] sm:$0xff]
          %v950 = vld [vmem:[#allocation2 + $0x20] sm:$0xff]
          %v951 = vld [vmem:[#allocation2 + $0x28] sm:$0xff]
          %v952 = vld [vmem:[#allocation2 + $0x30] sm:$0xff]
          %v953 = vld [vmem:[#allocation2 + $0x38] sm:$0xff]
          %v954 = vld [vmem:[#allocation2 + $0x40] sm:$0xff]
          %v955 = vld [vmem:[#allocation2 + $0x48] sm:$0xff]
          %v956 = vld [vmem:[#allocation2 + $0x50] sm:$0xff]
          %v957 = vld [vmem:[#allocation2 + $0x58] sm:$0xff]
          %v958 = vld [vmem:[#allocation2 + $0x60] sm:$0xff]
          %v959 = vld [vmem:[#allocation2 + $0x68] sm:$0xff]
          %v960 = vld [vmem:[#allocation2 + $0x70] sm:$0xff]
          %v961 = vld [vmem:[#allocation2 + $0x78] sm:$0xff]
          %v962 = vld [vmem:[%s4] sm:$0x1]
          %v964 = vlaneseq
          %v965 = vshrl.u32 %v964, 7
          %v966 = vsub.s32 0, %v965
          %v967 = vrot.slane %v962, %v966
          %v969 = vadd.f32 %v946, %v967
          %v970 = vadd.f32 %v947, %v967
          %v971 = vadd.f32 %v948, %v967
          %v972 = vadd.f32 %v949, %v967
          %v973 = vadd.f32 %v950, %v967
          %v974 = vadd.f32 %v951, %v967
          %v975 = vadd.f32 %v952, %v967
          %v976 = vadd.f32 %v953, %v967
          %v977 = vadd.f32 %v954, %v967
          %v978 = vadd.f32 %v955, %v967
          %v979 = vadd.f32 %v956, %v967
          %v980 = vadd.f32 %v957, %v967
          %v981 = vadd.f32 %v958, %v967
          %v982 = vadd.f32 %v959, %v967
          %v983 = vadd.f32 %v960, %v967
          %v984 = vadd.f32 %v961, %v967
          %v985 = vld [vmem:[%s287] sm:$0xff]
          %v986 = vld [vmem:[%s287 + $0x8] sm:$0xff]
          %v987 = vld [vmem:[%s287 + $0x10] sm:$0xff]
          %v988 = vld [vmem:[%s287 + $0x18] sm:$0xff]
          %v989 = vld [vmem:[%s287 + $0x20] sm:$0xff]
          %v990 = vld [vmem:[%s287 + $0x28] sm:$0xff]
          %v991 = vld [vmem:[%s287 + $0x30] sm:$0xff]
          %v992 = vld [vmem:[%s287 + $0x38] sm:$0xff]
          %v993 = vld [vmem:[%s287 + $0x40] sm:$0xff]
          %v994 = vld [vmem:[%s287 + $0x48] sm:$0xff]
          %v995 = vld [vmem:[%s287 + $0x50] sm:$0xff]
          %v996 = vld [vmem:[%s287 + $0x58] sm:$0xff]
          %v997 = vld [vmem:[%s287 + $0x60] sm:$0xff]
          %v998 = vld [vmem:[%s287 + $0x68] sm:$0xff]
          %v999 = vld [vmem:[%s287 + $0x70] sm:$0xff]
          %v1000 = vld [vmem:[%s287 + $0x78] sm:$0xff]
          %v1001 = vadd.f32 %v969, %v985
          %v1002 = vadd.f32 %v970, %v986
          %v1003 = vadd.f32 %v971, %v987
          %v1004 = vadd.f32 %v972, %v988
          %v1005 = vadd.f32 %v973, %v989
          %v1006 = vadd.f32 %v974, %v990
          %v1007 = vadd.f32 %v975, %v991
          %v1008 = vadd.f32 %v976, %v992
          %v1009 = vadd.f32 %v977, %v993
          %v1010 = vadd.f32 %v978, %v994
          %v1011 = vadd.f32 %v979, %v995
          %v1012 = vadd.f32 %v980, %v996
          %v1013 = vadd.f32 %v981, %v997
          %v1014 = vadd.f32 %v982, %v998
          %v1015 = vadd.f32 %v983, %v999
          %v1016 = vadd.f32 %v984, %v1000
          %1017 = vst [vmem:[%s345] sm:$0xff] %v1001
          %1018 = vst [vmem:[%s345 + $0x8] sm:$0xff] %v1002
          %1019 = vst [vmem:[%s345 + $0x10] sm:$0xff] %v1003
          %1020 = vst [vmem:[%s345 + $0x18] sm:$0xff] %v1004
          %1021 = vst [vmem:[%s345 + $0x20] sm:$0xff] %v1005
          %1022 = vst [vmem:[%s345 + $0x28] sm:$0xff] %v1006
          %1023 = vst [vmem:[%s345 + $0x30] sm:$0xff] %v1007
          %1024 = vst [vmem:[%s345 + $0x38] sm:$0xff] %v1008
          %1025 = vst [vmem:[%s345 + $0x40] sm:$0xff] %v1009
          %1026 = vst [vmem:[%s345 + $0x48] sm:$0xff] %v1010
          %1027 = vst [vmem:[%s345 + $0x50] sm:$0xff] %v1011
          %1028 = vst [vmem:[%s345 + $0x58] sm:$0xff] %v1012
          %1029 = vst [vmem:[%s345 + $0x60] sm:$0xff] %v1013
          %1030 = vst [vmem:[%s345 + $0x68] sm:$0xff] %v1014
          %1031 = vst [vmem:[%s345 + $0x70] sm:$0xff] %v1015
          %1032 = vst [vmem:[%s345 + $0x78] sm:$0xff] %v1016
        $region60: #{tpu_custom_call.1} parent=39 // pred_fallthru
          _
        %s1033 = sand.u32 %s170, 1
        %s1034 = scalar_lea.sflag [#allocation5], %s1033
        %s1035 = sand.u32 %s170, 1
        %s1036 = smul.addr %s1035, 128
        %s1037 = scalar_lea.vmem [#allocation9], %s1036
        // Predicated region
        $region61: #{tpu_custom_call.1} parent=39 // pred_check
          %p1038 = pneg %p180
        $region62: #{tpu_custom_call.1} parent=39 // pred_check_branch
          %1040 = sbr.rel (%p1038) target = $region64
        $region63: #{tpu_custom_call.1} parent=39 // pred_region
          %s1041 = smul.u32 16, %s29
          %s1043 = ssub.s32 2048, 2048
          %1044 = vsyncadd %s1034, %s1043
          %s1045 = smul.addr %s1041, 128
          %s1046 = scalar_lea.hbm %s5, %s1045
          %s1047 = sshll.u32 %s1037, 4
          %s1048 = int_to_ptr.vmem [resolvable:$true] %s1047
          %1053 = dma.vmem_to_hbm [thread:$0]  %s1048, 2048, %s1046, %s1034, 128, 128, 8
        $region64: #{tpu_custom_call.1} parent=39 // pred_fallthru
          _
      $region40: #{tpu_custom_call.1} parent=5 // pred_fallthru
        _
      %p1054 = scmp.le.s32.totalorder 2, %s20
      // Predicated region
      $region65: #{tpu_custom_call.1} parent=5 // pred_check
        %p1055 = pneg %p1054
      $region66: #{tpu_custom_call.1} parent=5 // pred_check_branch
        %1057 = sbr.rel (%p1055) target = $region68
      $region67: #{tpu_custom_call.1} parent=5 // pred_region
        %s1058 = ssub.s32 %s20, 2
        // Predicated region
        $region69: #{tpu_custom_call.1} parent=67 // pred_check
          %p1059 = pneg %p186
        $region70: #{tpu_custom_call.1} parent=67 // pred_check_branch
          %1061 = sbr.rel (%p1059) target = $region72
        $region71: #{tpu_custom_call.1} parent=67 // pred_region
          %s1062 = sand.u32 %s171, 1
          %s1063 = scalar_lea.sflag [#allocation5], %s1062
          %s1064 = sand.u32 %s171, 1
          %s1065 = smul.addr %s1064, 128
          %s1066 = scalar_lea.vmem [#allocation9], %s1065
          %1067 = dma.done %s1063, 2048
        $region72: #{tpu_custom_call.1} parent=67 // pred_fallthru
          _
      $region68: #{tpu_custom_call.1} parent=5 // pred_fallthru
        _
    $region6: #{tpu_custom_call.1} parent=1 // loop_footer
      %s24 = sadd.s32 1, %s20
    $region7: #{tpu_custom_call.1} parent=1 // loop_footer_branch
      %19 = sbr.rel target = $region3
    $region8: #{tpu_custom_call.1} parent=1 // loop_exit
      _
    %1068 = vsyncpa [#allocation4], 1
    %s1069 = scalar_lea.sflag [#allocation4], 1
    %1070 = vsyncpa %s1069, 1
    %1071 = vsyncpa [#allocation7], 1
    %s1072 = scalar_lea.sflag [#allocation7], 1
    %1073 = vsyncpa %s1072, 1
    %1074 = vsyncpa [#allocation5], 1
    %s1075 = scalar_lea.sflag [#allocation5], 1
    %1076 = vsyncpa %s1075, 1

</llo_original>
